<compile_context>
chip_gen: v5e
topology: v5e:2x2
jax: 0.10.0
libtpu: 0.0.40
codegen_flags: <defaults>
</compile_context>

<pallas_src>
import math

import numpy as np

import jax
import jax.numpy as jnp
from jax import lax
from jax.experimental import pallas as pl
from jax.experimental.pallas import tpu as pltpu

NEG = -1e30   # "-inf" for padded tags / transitions


# ---------------------------------------------------------------------------
# Kernel 1: hidden2tags linear projection (MXU, bf16 inputs, f32 accumulate)
# ---------------------------------------------------------------------------
def hidden2tags_kernel(x_ref, wt_ref, b_ref, out_ref):
    # Cast the activation tile to bf16 right before the MXU: single-pass bf16
    # matmul, f32 accumulation, f32 logits out.  (No-op if input is already bf16.)
    x = x_ref[...].astype(jnp.bfloat16)
    out_ref[...] = jnp.dot(x, wt_ref[...],
                           preferred_element_type=jnp.float32) + b_ref[...]


# ---------------------------------------------------------------------------
# Kernel 2: CRF Viterbi decode (time-major, batch-in-lanes)
# ---------------------------------------------------------------------------
def crf_viterbi_kernel(em_ref, len_ref, transT_ref, start_ref, end_ref,
                       paths_ref, hist_ref):
    S, Tp, BC = em_ref.shape
    PAD = jnp.int32(-1)

    lengths = len_ref[...]                         # (1, BC) i32, loaded once
    seq_end = lengths - 1                          # (1, BC)

    transT = transT_ref[...]                       # (Tp_cur, Tp_prev)
    # Hoist loop-invariant broadcasts out of the recursion.
    trans_cols = [jnp.broadcast_to(transT[:, p:p + 1], (Tp, BC))
                  for p in range(Tp)]              # trans[prev=p, cur] per cur-sublane
    tag_iota = lax.broadcasted_iota(jnp.int32, (Tp, BC), 0)   # tag id per sublane
    zeros_i = jnp.zeros((Tp, BC), jnp.int32)

    hist_ref[0] = zeros_i                          # slot 0 read but never used
    unroll = True if S <= 64 else 8

    # ---------------- forward recursion ----------------
    score0 = start_ref[...] + em_ref[0]            # (Tp, 1) + (Tp, BC) -> (Tp, BC)

    def viterbi_step(score):
        # Running max / argmax over prev tags: Tp elementwise VPU passes on
        # (Tp_cur, BC) tiles; strict ">" keeps the first occurrence on ties.
        m = score[0:1, :] + trans_cols[0]
        a = zeros_i
        for p in range(1, Tp):
            c = score[p:p + 1, :] + trans_cols[p]
            take = c > m
            m = jnp.where(take, c, m)
            a = jnp.where(take, jnp.int32(p), a)
        return m, a

    def fwd(t, score):
        em_t = em_ref[t]                                          # aligned (Tp, BC) load
        m, best_prev = viterbi_step(score)
        hist_ref[t] = best_prev
        nxt = m + em_t
        return jnp.where(lengths > t, nxt, score)                 # per-lane seq mask

    score = lax.fori_loop(1, S, fwd, score0, unroll=unroll)
    final = score + end_ref[...]                                  # (Tp, BC)

    # ---------------- backtrace (lane-dense per-step row writes) ------------
    fmax = jnp.max(final, axis=0, keepdims=True)                  # (1, BC)
    cur0 = jnp.min(jnp.where(final == fmax, tag_iota, jnp.int32(Tp)),
                   axis=0, keepdims=True).astype(jnp.int32)       # (1, BC)

    def bwd(i, cur):
        t = S - 1 - i
        active = seq_end >= t                                     # (1, BC)
        paths_ref[t] = jnp.where(active, cur, PAD)                # (1, BC) row store
        hist_t = hist_ref[t]                                      # (Tp, BC)
        # gather prev tag per lane via one-hot over the (small) sublane axis
        prev = jnp.sum(jnp.where(tag_iota == cur, hist_t, 0),
                       axis=0, keepdims=True)                     # (1, BC)
        return jnp.where(jnp.logical_and(active, t >= 1), prev, cur)

    lax.fori_loop(0, S, bwd, cur0, unroll=unroll)


# ---------------------------------------------------------------------------
# Wrapper
# ---------------------------------------------------------------------------
def tagger_head_decode(emissions, mask, params):
    """emissions: (B, S, H) f32 (or bf16), mask: (B, S) {0,1} contiguous-prefix.
    Returns (B, S) int32 best tag paths, padded with -1 past each length."""
    B, S, H = emissions.shape
    W = params["weight"]                                   # (T, H)
    T = W.shape[0]
    Tp = max(8, ((T + 7) // 8) * 8)                        # pad tag dim to sublane multiple
    rows = B * S

    # ---- phase 1: projection, batch-first, no transpose of the big activation
    x2d = emissions.reshape(rows, H)                       # free reshape
    wt = jnp.zeros((H, Tp), jnp.bfloat16).at[:, :T].set(
        jnp.transpose(W).astype(jnp.bfloat16))
    b2 = jnp.zeros((1, Tp), jnp.float32).at[:, :T].set(
        params["bias"].astype(jnp.float32))

    # Large row tile (read-bound kernel); rows >= 2048 keeps >= 2 grid steps
    # for v7x's two TensorCores.  Double-buffered input stays well under the
    # 32 MiB scoped-VMEM limit (fits v5e/v6e 128 MiB and v7x 64 MiB).
    TR = rows if rows <= 1024 else 1024
    logits = pl.pallas_call(
        hidden2tags_kernel,
        out_shape=jax.ShapeDtypeStruct((rows, Tp), jnp.float32),
        grid=(pl.cdiv(rows, TR),),
        in_specs=[pl.BlockSpec((TR, H), lambda i: (i, 0)),
                  pl.BlockSpec((H, Tp), lambda i: (0, 0)),
                  pl.BlockSpec((1, Tp), lambda i: (0, 0))],
        out_specs=pl.BlockSpec((TR, Tp), lambda i: (i, 0)),
        compiler_params=pltpu.CompilerParams(
            dimension_semantics=("parallel",),
            vmem_limit_bytes=32 * 1024 * 1024),
    )(x2d, wt, b2)

    # tiny (B*S, Tp) logits -> batch-in-lanes time-major (S, Tp, B) for the CRF.
    # (Only Tp/H of the activation traffic; the fused permutation would need an
    # in-kernel 3-D transpose, so it stays an XLA re-layout of the small array.)
    em_tb = jnp.transpose(logits.reshape(B, S, Tp), (1, 2, 0))    # (S, Tp, B)

    # per-batch lengths replace the (S, B) mask (contiguous-prefix assumption,
    # same as torchcrf's backtrace); kept (1, B) so batch sits in lanes.
    lengths_row = jnp.sum(mask.astype(jnp.int32), axis=1).reshape(1, B)

    neg = jnp.float32(NEG)
    transT = jnp.full((Tp, Tp), neg, jnp.float32).at[:T, :T].set(
        jnp.transpose(params["transitions"]).astype(jnp.float32))   # [cur, prev]
    start_c = jnp.full((Tp, 1), neg, jnp.float32).at[:T, :].set(
        params["start"].astype(jnp.float32).reshape(T, 1))
    end_c = jnp.full((Tp, 1), neg, jnp.float32).at[:T, :].set(
        params["end"].astype(jnp.float32).reshape(T, 1))

    # ---- phase 2: Viterbi decode, one large lane-dense batch chunk per step
    if B > 256:
        BC = 128                                           # 128-lane chunks
        Bp = ((B + BC - 1) // BC) * BC
    else:
        BC = Bp = B                                        # single chunk, full-dim block
    if Bp != B:
        em_tb = jnp.pad(em_tb, ((0, 0), (0, 0), (0, Bp - B)))
        lengths_row = jnp.pad(lengths_row, ((0, 0), (0, Bp - B)))
    num_chunks = Bp // BC

    paths_tm = pl.pallas_call(
        crf_viterbi_kernel,
        out_shape=jax.ShapeDtypeStruct((S, 1, Bp), jnp.int32),
        grid=(num_chunks,),
        in_specs=[pl.BlockSpec((S, Tp, BC), lambda c: (0, 0, c)),
                  pl.BlockSpec((1, BC), lambda c: (0, c)),
                  pl.BlockSpec((Tp, Tp), lambda c: (0, 0)),
                  pl.BlockSpec((Tp, 1), lambda c: (0, 0)),
                  pl.BlockSpec((Tp, 1), lambda c: (0, 0))],
        out_specs=pl.BlockSpec((S, 1, BC), lambda c: (0, 0, c)),
        scratch_shapes=[pltpu.VMEM((S, Tp, BC), jnp.int32)],   # Viterbi backpointers
        compiler_params=pltpu.CompilerParams(
            dimension_semantics=("parallel",)),
    )(em_tb, lengths_row, transT, start_c, end_c)

    return jnp.transpose(paths_tm[:, 0, :B], (1, 0))       # (B, S), pad = -1


# ---------------------------------------------------------------------------
# Parameter init (mirrors the PyTorch module's init)
# ---------------------------------------------------------------------------
def init_params(key, hidden_dim, num_tags):
    k1, k2, k3, k4, k5 = jax.random.split(key, 5)
    std = math.sqrt(2.0 / (hidden_dim + num_tags))        # xavier_normal_, gain=1
    return dict(
        weight=std * jax.random.normal(k1, (num_tags, hidden_dim), jnp.float32),
        bias=jax.random.normal(k2, (num_tags,), jnp.float32),           # init.normal_
        start=jax.random.uniform(k3, (num_tags,), jnp.float32, -0.1, 0.1),
        end=jax.random.uniform(k4, (num_tags,), jnp.float32, -0.1, 0.1),
        transitions=jax.random.uniform(k5, (num_tags, num_tags), jnp.float32, -0.1, 0.1),
    )


# ---------------------------------------------------------------------------
# Pure NumPy reference (torchcrf CRF._viterbi_decode semantics), mirroring the
# kernel's bf16 matmul inputs / f32 accumulation.
# ---------------------------------------------------------------------------
def reference_decode(x, mask, p):
    xq = np.asarray(jnp.asarray(x).astype(jnp.bfloat16).astype(jnp.float32))
    Wq = np.asarray(jnp.asarray(p["weight"]).astype(jnp.bfloat16).astype(jnp.float32))
    b = np.asarray(p["bias"], np.float32)
    trans = np.asarray(p["transitions"], np.float32)
    start = np.asarray(p["start"], np.float32)
    end = np.asarray(p["end"], np.float32)
    B, S, _ = x.shape
    logits = (xq @ Wq.T + b).astype(np.float32)            # (B, S, T)
    em = np.transpose(logits, (1, 0, 2))                   # (S, B, T)
    m = np.asarray(mask).astype(bool).T                    # (S, B)
    score = start[None, :] + em[0]                         # (B, T)
    history = []
    for i in range(1, S):
        nxt = score[:, :, None] + trans[None, :, :] + em[i][:, None, :]  # (B, prev, cur)
        history.append(nxt.argmax(axis=1))
        ns = nxt.max(axis=1)
        score = np.where(m[i][:, None], ns, score)
    score = score + end[None, :]
    seq_ends = m.sum(0) - 1
    out = np.full((B, S), -1, np.int32)
    for bi in range(B):
        best = int(score[bi].argmax())
        tags = [best]
        for hist in reversed(history[:seq_ends[bi]]):
            best = int(hist[bi][tags[-1]])
            tags.append(best)
        tags.reverse()
        out[bi, :len(tags)] = tags
    return out, logits


def path_scores(logits, lengths, paths, p):
    trans = np.asarray(p["transitions"], np.float64)
    start = np.asarray(p["start"], np.float64)
    end = np.asarray(p["end"], np.float64)
    em = logits.astype(np.float64)
    B = em.shape[0]
    out = np.zeros((B,), np.float64)
    for b in range(B):
        L = int(lengths[b])
        tags = paths[b, :L]
        s = start[tags[0]] + em[b, 0, tags[0]]
        for t in range(1, L):
            s += trans[tags[t - 1], tags[t]] + em[b, t, tags[t]]
        out[b] = s + end[tags[-1]]
    return out


if __name__ == "__main__":
    B, S, H = 2, 8, 32
    dict2id = {"O": 0, "B-PER": 1, "I-PER": 2, "B-LOC": 3, "I-LOC": 4}
    T = len(dict2id)

    key = jax.random.PRNGKey(0)
    kx, kp = jax.random.split(key)
    emissions = jax.random.normal(kx, (B, S, H), jnp.float32)
    lengths = jnp.array([S, 5], dtype=jnp.int32)
    mask = (jnp.arange(S)[None, :] < lengths[:, None]).astype(jnp.int32)   # (B, S)

    params = init_params(kp, H, T)

    paths = jax.block_until_ready(tagger_head_decode(emissions, mask, params))
    paths_np = np.asarray(paths)

    np_params = {k: np.asarray(v) for k, v in params.items()}
    ref, logits_ref = reference_decode(np.asarray(emissions), np.asarray(mask), np_params)
    lengths_np = np.asarray(lengths)

    if not np.array_equal(paths_np, ref):
        # bf16 MXU rounding can flip an argmax only under (near-)ties; both
        # decodes must then still be Viterbi-optimal: same padding, equal scores.
        assert np.array_equal(paths_np == -1, ref == -1), (paths_np, ref)
        sk = path_scores(logits_ref, lengths_np, paths_np, np_params)
        sr = path_scores(logits_ref, lengths_np, ref, np_params)
        assert np.allclose(sk, sr, atol=1e-3), (paths_np, ref, sk, sr)

    # TODO(synk): torchcrf returns ragged Python List[List[int]]; kernel emits a
    # dense (B, S) int32 array padded with -1 past each sequence length instead.
    print("KERNEL_OK")
</pallas_src>

<mosaic_0001>
module attributes {stable_mosaic.version = 11 : i64} {
  func.func @hidden2tags_kernel(%arg0: i32, %arg1: memref<16x32xf32, #tpu.memory_space<vmem>>, %arg2: memref<32x8xbf16, #tpu.memory_space<vmem>>, %arg3: memref<1x8xf32, #tpu.memory_space<vmem>>, %arg4: memref<16x8xf32, #tpu.memory_space<vmem>>) attributes {dimension_semantics = [#tpu.dimension_semantics<parallel>], iteration_bounds = array<i64: 1>, scalar_prefetch = 0 : i64, scratch_operands = 0 : i64, tpu.core_type = #tpu.core_type<tc>, window_params = [{transform_indices = @transform_0, window_bounds = array<i64: 16, 32>}, {pipeline_mode = #tpu.pipeline_mode<synchronous>, transform_indices = @transform_1, window_bounds = array<i64: 32, 8>}, {pipeline_mode = #tpu.pipeline_mode<synchronous>, transform_indices = @transform_2, window_bounds = array<i64: 1, 8>}, {transform_indices = @transform_3, window_bounds = array<i64: 16, 8>}]} {
    %c0 = arith.constant 0 : index
    %c0_0 = arith.constant 0 : index
    %0 = vector.load %arg1[%c0, %c0_0] : memref<16x32xf32, #tpu.memory_space<vmem>>, vector<16x32xf32>
    %1 = arith.truncf %0 : vector<16x32xf32> to vector<16x32xbf16>
    %c0_1 = arith.constant 0 : index
    %c0_2 = arith.constant 0 : index
    %2 = vector.load %arg2[%c0_1, %c0_2] : memref<32x8xbf16, #tpu.memory_space<vmem>>, vector<32x8xbf16>
    %cst = arith.constant dense<0.000000e+00> : vector<16x8xf32>
    %3 = tpu.matmul %1, %2, %cst {dimension_numbers = #tpu.dot_dimension_numbers<[1], [0], [0], [1], [0, 0, 1, 1], [], []>} : vector<16x32xbf16>, vector<32x8xbf16>, vector<16x8xf32> -> vector<16x8xf32>
    %c0_3 = arith.constant 0 : index
    %c0_4 = arith.constant 0 : index
    %4 = vector.load %arg3[%c0_3, %c0_4] : memref<1x8xf32, #tpu.memory_space<vmem>>, vector<1x8xf32>
    %5 = vector.broadcast %4 : vector<1x8xf32> to vector<16x8xf32>
    %6 = arith.addf %3, %5 : vector<16x8xf32>
    %c0_5 = arith.constant 0 : index
    %c0_6 = arith.constant 0 : index
    %7 = vector.load %arg4[%c0_5, %c0_6] : memref<16x8xf32, #tpu.memory_space<vmem>>, vector<16x8xf32>
    tpu.vector_store %arg4[%c0_5, %c0_6], %6 {strides = array<i32>} : memref<16x8xf32, #tpu.memory_space<vmem>>, vector<16x8xf32>,
    return
  }
  func.func @transform_0(%arg0: i32) -> (i32, i32) {
    %c0_i32 = arith.constant 0 : i32
    %c0_i32_0 = arith.constant 0 : i32
    return %arg0, %c0_i32 : i32, i32
  }
  func.func @transform_1(%arg0: i32) -> (i32, i32) {
    %c0_i32 = arith.constant 0 : i32
    %c0_i32_0 = arith.constant 0 : i32
    %c0_i32_1 = arith.constant 0 : i32
    return %c0_i32, %c0_i32_0 : i32, i32
  }
  func.func @transform_2(%arg0: i32) -> (i32, i32) {
    %c0_i32 = arith.constant 0 : i32
    %c0_i32_0 = arith.constant 0 : i32
    %c0_i32_1 = arith.constant 0 : i32
    return %c0_i32, %c0_i32_0 : i32, i32
  }
  func.func @transform_3(%arg0: i32) -> (i32, i32) {
    %c0_i32 = arith.constant 0 : i32
    %c0_i32_0 = arith.constant 0 : i32
    return %arg0, %c0_i32 : i32, i32
  }
}

</mosaic_0001>

<llo_original>
// kernel: tpu_custom_call.1
$region0: #{tpu_custom_call.1}
  #allocation0 [shape = 'u32[]', space=smem, size = 0x4, offset = 0x4, fixed_abs, tag = 'smem constant byte address 0x4 - core index']
  #allocation1 [shape = 'u32[72,128]{1,0:T(1,128)}', space=vmem, size = 0x9000, scoped, tag = 'internal scratch']
  %s0 = inlined_call_operand.vmem [shape: f32[16,32], index: 0, kind: input, shape index: {}]
  %s1 = inlined_call_operand.vmem [shape: bf16[32,8], index: 1, kind: input, shape index: {}]
  %s2 = inlined_call_operand.vmem [shape: f32[1,8], index: 2, kind: input, shape index: {}]
  %s3 = inlined_call_operand.vmem [shape: f32[16,8], index: 3, kind: output, shape index: {}]
  %s4 = sld [smem:[#allocation0]]
  $region22: #{tpu_custom_call.1} parent=0
    _
  %s6 = ssub.s32 1, %s4
  %s7 = scalar_select 0, %s6, %s4
  // Predicated region
  $region2: #{tpu_custom_call.1} parent=0 // pred_check
    _
  $region3: #{tpu_custom_call.1} parent=0 // pred_check_branch
    %9 = sbr.rel (0) target = $region5
  $region4: #{tpu_custom_call.1} parent=0 // pred_region
    _
  $region5: #{tpu_custom_call.1} parent=0 // pred_fallthru
    _
  // Predicated region
  $region6: #{tpu_custom_call.1} parent=0 // pred_check
    _
  $region7: #{tpu_custom_call.1} parent=0 // pred_check_branch
    %11 = sbr.rel (0) target = $region9
  $region8: #{tpu_custom_call.1} parent=0 // pred_region
    _
  $region9: #{tpu_custom_call.1} parent=0 // pred_fallthru
    _
  // Predicated region
  $region10: #{tpu_custom_call.1} parent=0 // pred_check
    _
  $region11: #{tpu_custom_call.1} parent=0 // pred_check_branch
    %13 = sbr.rel (0) target = $region13
  $region12: #{tpu_custom_call.1} parent=0 // pred_region
    _
  $region13: #{tpu_custom_call.1} parent=0 // pred_fallthru
    _
  %v15 = vld [vmem:[%s0] sm:$0xff]
  %v16 = vld [vmem:[%s0 + $0x8] sm:$0xff]
  %v17 = vpack.c.bf16 %v16, %v15
  %v18 = vld [vmem:[%s1] sm:$0xf]
  %v19 = vld [vmem:[%s1 + $0x4] sm:$0xf]
  %v20 = vld [vmem:[%s1 + $0x8] sm:$0xf]
  %v21 = vld [vmem:[%s1 + $0xc] sm:$0xf]
  %v22 = vld [vmem:[%s2] sm:$0x1]
  %v24 = vperm.slane %v22, 0
  %v30 = vunpack.c.l.b16 %v18
  %v31 = vunpack.c.l.b16 %v19
  %v32 = vunpack.c.l.b16 %v20
  %v33 = vunpack.c.l.b16 %v21
  %v34 = vpack.c.b16 %v31, %v30
  %v35 = vpack.c.b16 %v33, %v32
  %vm38 = vcmask 261120
  %v40 = vsel %vm38, %v17, 0
  %42 = vmatpush.bf16.msra.mxu0 0
  %43 = vmatpush.bf16.msra.mxu0 0
  %44 = vmatpush.bf16.msra.mxu0 0
  %45 = vmatpush.bf16.msra.mxu0 0
  %46 = vmatpush.bf16.msra.mxu0 0
  %47 = vmatpush.bf16.msra.mxu0 0
  %48 = vmatpush.bf16.msra.mxu0 %v35
  %49 = vmatpush.bf16.msra.mxu0 %v34
  %50 = vmatmul.bf16.gmra.mxu0 %v40
  %v51 = vpop.f32.mrf.mxu0
  %v52 = vadd.f32 %v24, %v51
  %v53 = vpop.f32.mrf.mxu0
  %v54 = vadd.f32 %v24, %v53
  %55 = vdwg.mxu0
  %vm56 = vcmask 64512
  %57 = vst.msk [vmem:[%s3] sm:$0xff] %vm56, %v52
  %58 = vst.msk [vmem:[%s3 + $0x8] sm:$0xff] %vm56, %v54
  // Predicated region
  $region14: #{tpu_custom_call.1} parent=0 // pred_check
    _
  $region15: #{tpu_custom_call.1} parent=0 // pred_check_branch
    %60 = sbr.rel (0) target = $region17
  $region16: #{tpu_custom_call.1} parent=0 // pred_region
    _
  $region17: #{tpu_custom_call.1} parent=0 // pred_fallthru
    _
  // Predicated region
  $region18: #{tpu_custom_call.1} parent=0 // pred_check
    _
  $region19: #{tpu_custom_call.1} parent=0 // pred_check_branch
    %62 = sbr.rel (0) target = $region21
  $region20: #{tpu_custom_call.1} parent=0 // pred_region
    _
  $region21: #{tpu_custom_call.1} parent=0 // pred_fallthru
    _

</llo_original>
